<compile_context>
chip_gen: v5e
topology: v5e:2x2
jax: 0.10.0
libtpu: 0.0.40
codegen_flags: <defaults>
</compile_context>

<pallas_src>
import jax
import jax.numpy as jnp
from jax import lax
from jax.experimental import pallas as pl
from jax.experimental.pallas import tpu as pltpu

LANE = 128
TM_MAX = 2048        # 2048 rows x 128 lanes x 4 B = 1 MiB per input block
NUM_SPLITS = 2       # leading "parallel" grid axis -> both TensorCores on v7x


def _make_wape_kernel(rows: int, tm: int, steps: int, needs_mask: bool):
    """Builds the WAPE partial-sum kernel (rows/tm/steps are trace-time ints)."""

    def kernel(x_ref, t_ref, num_ref, den_ref):
        c = pl.program_id(0)          # parallel split (megacore on v7x)
        i = pl.program_id(1)          # sequential reduction steps

        @pl.when(i == 0)
        def _():
            num_ref[...] = jnp.zeros_like(num_ref)
            den_ref[...] = jnp.zeros_like(den_ref)

        x = x_ref[...].astype(jnp.float32)
        t = t_ref[...].astype(jnp.float32)
        d = jnp.abs(x - t)
        a = jnp.abs(t)

        if needs_mask:
            # Logical (unclamped) block index; rows at/after `rows` are zeroed
            # out so clamped / ragged blocks contribute nothing.
            blk = c * steps + i
            valid = rows - blk * tm
            row_ids = lax.broadcasted_iota(jnp.int32, (tm, LANE), 0)
            keep = row_ids < valid
            d = jnp.where(keep, d, 0.0)
            a = jnp.where(keep, a, 0.0)

        # Per-lane partial sums -> hot loop stays on the VPU; the expensive
        # cross-lane reduce happens once, outside, on a tiny array.
        num_ref[...] += jnp.sum(d, axis=0, keepdims=True).reshape(1, 1, LANE)
        den_ref[...] += jnp.sum(a, axis=0, keepdims=True).reshape(1, 1, LANE)

    return kernel


def _wape_impl(input_arr: jax.Array, target_arr: jax.Array) -> jax.Array:
    assert input_arr.shape == target_arr.shape
    eps = jnp.float32(1e-8)

    x = input_arr.reshape(-1)
    t = target_arr.reshape(-1)
    n = x.shape[0]
    if n == 0:
        return jnp.float32(0.0)

    # Pad only when numel is not a multiple of 128 (zero padding is exact for
    # WAPE: adds 0 to both sums). Otherwise reshape is a free bitcast.
    if n % LANE != 0:
        pad = LANE - (n % LANE)
        x = jnp.pad(x, (0, pad))
        t = jnp.pad(t, (0, pad))
    rows = x.shape[0] // LANE
    x = x.reshape(rows, LANE)
    t = t.reshape(rows, LANE)

    rows_per_split = pl.cdiv(rows, NUM_SPLITS)
    tm = min(TM_MAX, pl.cdiv(rows_per_split, 8) * 8)   # sublane-aligned block
    steps = pl.cdiv(rows_per_split, tm)
    total_blocks = pl.cdiv(rows, tm)
    last_block = total_blocks - 1
    needs_mask = (NUM_SPLITS * steps * tm) != rows

    def in_index(c, i):
        # Clamp so every DMA'd block starts in-bounds; the in-kernel mask
        # zeroes any duplicated / ragged rows.
        return (jnp.minimum(c * steps + i, last_block), 0)

    kernel = _make_wape_kernel(rows, tm, steps, needs_mask)

    num_parts, den_parts = pl.pallas_call(
        kernel,
        out_shape=(
            jax.ShapeDtypeStruct((NUM_SPLITS, 1, LANE), jnp.float32),
            jax.ShapeDtypeStruct((NUM_SPLITS, 1, LANE), jnp.float32),
        ),
        grid_spec=pltpu.PrefetchScalarGridSpec(
            num_scalar_prefetch=0,
            grid=(NUM_SPLITS, steps),
            in_specs=[
                pl.BlockSpec((tm, LANE), in_index),
                pl.BlockSpec((tm, LANE), in_index),
            ],
            out_specs=[
                pl.BlockSpec((1, 1, LANE), lambda c, i: (c, 0, 0)),
                pl.BlockSpec((1, 1, LANE), lambda c, i: (c, 0, 0)),
            ],
        ),
        compiler_params=pltpu.CompilerParams(
            dimension_semantics=("parallel", "arbitrary")),
    )(x, t)

    num = jnp.sum(num_parts)
    den = jnp.sum(den_parts)
    return num / (den + eps)


wape = jax.jit(_wape_impl)


if __name__ == "__main__":
    key = jax.random.PRNGKey(0)
    k1, k2 = jax.random.split(key)
    # Small NCHW-like shapes consistent with a typical use of this metric.
    shape = (2, 4, 16, 16)
    inp = jax.random.normal(k1, shape, dtype=jnp.float32)
    tgt = jax.random.normal(k2, shape, dtype=jnp.float32)

    result = jax.block_until_ready(wape(inp, tgt))

    # Pure-JAX reference check.
    ref = jnp.sum(jnp.abs(inp - tgt)) / (jnp.sum(jnp.abs(tgt)) + 1e-08)
    assert jnp.allclose(result, ref, rtol=1e-5, atol=1e-6), (result, ref)

    print("KERNEL_OK")
</pallas_src>

<mosaic_0001>
module attributes {stable_mosaic.version = 11 : i64} {
  func.func @kernel(%arg0: i32, %arg1: i32, %arg2: memref<8x128xf32, #tpu.memory_space<vmem>>, %arg3: memref<8x128xf32, #tpu.memory_space<vmem>>, %arg4: memref<1x1x128xf32, #tpu.memory_space<vmem>>, %arg5: memref<1x1x128xf32, #tpu.memory_space<vmem>>) attributes {dimension_semantics = [#tpu.dimension_semantics<parallel>, #tpu.dimension_semantics<arbitrary>], iteration_bounds = array<i64: 2, 1>, scalar_prefetch = 0 : i64, scratch_operands = 0 : i64, tpu.core_type = #tpu.core_type<tc>, window_params = [{transform_indices = @transform_0, window_bounds = array<i64: 8, 128>}, {transform_indices = @transform_1, window_bounds = array<i64: 8, 128>}, {transform_indices = @transform_2, window_bounds = array<i64: 1, 1, 128>}, {transform_indices = @transform_3, window_bounds = array<i64: 1, 1, 128>}]} {
    %c0_i32 = arith.constant 0 : i32
    %0 = arith.cmpi eq, %arg1, %c0_i32 : i32
    %1 = arith.extui %0 : i1 to i32
    %c0_i32_0 = arith.constant 0 : i32
    %2 = arith.cmpi ne, %1, %c0_i32_0 : i32
    scf.if %2 {
      %cst_17 = arith.constant 0.000000e+00 : f32
      %20 = vector.broadcast %cst_17 : f32 to vector<1x1x128xf32>
      %c0_18 = arith.constant 0 : index
      %c0_19 = arith.constant 0 : index
      %c0_20 = arith.constant 0 : index
      %21 = vector.load %arg4[%c0_18, %c0_19, %c0_20] : memref<1x1x128xf32, #tpu.memory_space<vmem>>, vector<1x1x128xf32>
      tpu.vector_store %arg4[%c0_18, %c0_19, %c0_20], %20 {strides = array<i32>} : memref<1x1x128xf32, #tpu.memory_space<vmem>>, vector<1x1x128xf32>,
      %cst_21 = arith.constant 0.000000e+00 : f32
      %22 = vector.broadcast %cst_21 : f32 to vector<1x1x128xf32>
      %c0_22 = arith.constant 0 : index
      %c0_23 = arith.constant 0 : index
      %c0_24 = arith.constant 0 : index
      %23 = vector.load %arg5[%c0_22, %c0_23, %c0_24] : memref<1x1x128xf32, #tpu.memory_space<vmem>>, vector<1x1x128xf32>
      tpu.vector_store %arg5[%c0_22, %c0_23, %c0_24], %22 {strides = array<i32>} : memref<1x1x128xf32, #tpu.memory_space<vmem>>, vector<1x1x128xf32>,
    } else {
    }
    %c0 = arith.constant 0 : index
    %c0_1 = arith.constant 0 : index
    %3 = vector.load %arg2[%c0, %c0_1] : memref<8x128xf32, #tpu.memory_space<vmem>>, vector<8x128xf32>
    %c0_2 = arith.constant 0 : index
    %c0_3 = arith.constant 0 : index
    %4 = vector.load %arg3[%c0_2, %c0_3] : memref<8x128xf32, #tpu.memory_space<vmem>>, vector<8x128xf32>
    %5 = arith.subf %3, %4 : vector<8x128xf32>
    %6 = math.absf %5 : vector<8x128xf32>
    %7 = math.absf %4 : vector<8x128xf32>
    %c0_4 = arith.constant 0 : index
    %c0_5 = arith.constant 0 : index
    %c0_6 = arith.constant 0 : index
    %8 = vector.load %arg4[%c0_4, %c0_5, %c0_6] : memref<1x1x128xf32, #tpu.memory_space<vmem>>, vector<1x1x128xf32>
    %cst = arith.constant dense<0.000000e+00> : vector<128xf32>
    %9 = vector.multi_reduction <add>, %6, %cst [0] : vector<8x128xf32> to vector<128xf32>
    %10 = vector.shape_cast %9 : vector<128xf32> to vector<1x128xf32>
    %11 = vector.shape_cast %10 : vector<1x128xf32> to vector<1x1x128xf32>
    %12 = arith.addf %8, %11 : vector<1x1x128xf32>
    %c0_7 = arith.constant 0 : index
    %c0_8 = arith.constant 0 : index
    %c0_9 = arith.constant 0 : index
    %13 = vector.load %arg4[%c0_7, %c0_8, %c0_9] : memref<1x1x128xf32, #tpu.memory_space<vmem>>, vector<1x1x128xf32>
    tpu.vector_store %arg4[%c0_7, %c0_8, %c0_9], %12 {strides = array<i32>} : memref<1x1x128xf32, #tpu.memory_space<vmem>>, vector<1x1x128xf32>,
    %c0_10 = arith.constant 0 : index
    %c0_11 = arith.constant 0 : index
    %c0_12 = arith.constant 0 : index
    %14 = vector.load %arg5[%c0_10, %c0_11, %c0_12] : memref<1x1x128xf32, #tpu.memory_space<vmem>>, vector<1x1x128xf32>
    %cst_13 = arith.constant dense<0.000000e+00> : vector<128xf32>
    %15 = vector.multi_reduction <add>, %7, %cst_13 [0] : vector<8x128xf32> to vector<128xf32>
    %16 = vector.shape_cast %15 : vector<128xf32> to vector<1x128xf32>
    %17 = vector.shape_cast %16 : vector<1x128xf32> to vector<1x1x128xf32>
    %18 = arith.addf %14, %17 : vector<1x1x128xf32>
    %c0_14 = arith.constant 0 : index
    %c0_15 = arith.constant 0 : index
    %c0_16 = arith.constant 0 : index
    %19 = vector.load %arg5[%c0_14, %c0_15, %c0_16] : memref<1x1x128xf32, #tpu.memory_space<vmem>>, vector<1x1x128xf32>
    tpu.vector_store %arg5[%c0_14, %c0_15, %c0_16], %18 {strides = array<i32>} : memref<1x1x128xf32, #tpu.memory_space<vmem>>, vector<1x1x128xf32>,
    return
  }
  func.func @transform_0(%arg0: i32, %arg1: i32) -> (i32, i32) {
    %c1_i32 = arith.constant 1 : i32
    %0 = arith.muli %arg0, %c1_i32 : i32
    %1 = arith.addi %0, %arg1 : i32
    %c1_i32_0 = arith.constant 1 : i32
    %2 = arith.minsi %1, %c1_i32_0 : i32
    %c0_i32 = arith.constant 0 : i32
    %c0_i32_1 = arith.constant 0 : i32
    return %2, %c0_i32 : i32, i32
  }
  func.func @transform_1(%arg0: i32, %arg1: i32) -> (i32, i32) {
    %c1_i32 = arith.constant 1 : i32
    %0 = arith.muli %arg0, %c1_i32 : i32
    %1 = arith.addi %0, %arg1 : i32
    %c1_i32_0 = arith.constant 1 : i32
    %2 = arith.minsi %1, %c1_i32_0 : i32
    %c0_i32 = arith.constant 0 : i32
    %c0_i32_1 = arith.constant 0 : i32
    return %2, %c0_i32 : i32, i32
  }
  func.func @transform_2(%arg0: i32, %arg1: i32) -> (i32, i32, i32) {
    %c0_i32 = arith.constant 0 : i32
    %c0_i32_0 = arith.constant 0 : i32
    %c0_i32_1 = arith.constant 0 : i32
    return %arg0, %c0_i32, %c0_i32_0 : i32, i32, i32
  }
  func.func @transform_3(%arg0: i32, %arg1: i32) -> (i32, i32, i32) {
    %c0_i32 = arith.constant 0 : i32
    %c0_i32_0 = arith.constant 0 : i32
    %c0_i32_1 = arith.constant 0 : i32
    return %arg0, %c0_i32, %c0_i32_0 : i32, i32, i32
  }
}

</mosaic_0001>

<llo_original>
// kernel: _wape_impl.1
$region0: #{_wape_impl.1}
  #allocation0 [shape = 'u32[]', space=smem, size = 0x4, offset = 0x4, fixed_abs, tag = 'smem constant byte address 0x4 - core index']
  #allocation1 [shape = 'u32[72,128]{1,0:T(1,128)}', space=vmem, size = 0x9000, scoped, tag = 'internal scratch']
  %s0 = inlined_call_operand.vmem [shape: f32[16,128], index: 0, kind: input, shape index: {}]
  %s1 = inlined_call_operand.vmem [shape: f32[16,128], index: 1, kind: input, shape index: {}]
  %s2 = inlined_call_operand.vmem [shape: f32[2,1,128], index: 2, kind: output, shape index: {0}]
  %s3 = inlined_call_operand.vmem [shape: f32[2,1,128], index: 3, kind: output, shape index: {1}]
  %4 = xla_tuple %s2, %s3
  %s5 = sld [smem:[#allocation0]]
  $region53: #{_wape_impl.1} parent=0
    _
  %s7 = ssub.s32 1, %s5
  %s8 = scalar_select 0, %s7, %s5
  loop: start=0, step=1, limit=4
  $region2: #{_wape_impl.1} parent=0 // loop_pre_header
    _
  $region3: #{_wape_impl.1} parent=0 // loop_header
    %s10 = sphi 0, %s14
    %p11 = scmp.ge.s32.totalorder %s10, 4
    %s17 = sphi 0, %s29
    %s18 = sphi 0, %s25
    %s19 = sphi 0, %s17
    %s20 = sphi 0, %s18
    %s21 = sphi 0, %s19
    %s22 = sphi 0, %s20
    %s38 = sphi 0, %s40
    %s41 = sphi 0, %s38
    %s42 = sphi 0, %s41
    %s58 = sphi 0, %s42
    %s70 = sphi 0, %s72
    %s73 = sphi 0, %s70
    %s74 = sphi 0, %s73
    %s90 = sphi 0, %s74
    %s96 = sphi 0, %s98
    %s99 = sphi 0, %s96
    %s100 = sphi 0, %s99
    %s116 = sphi 0, %s100
    %s122 = sphi 0, %s124
    %s125 = sphi 0, %s122
    %s126 = sphi 0, %s125
    %s142 = sphi 0, %s126
  $region4: #{_wape_impl.1} parent=0 // loop_header_branch
    %13 = sbr.rel (%p11) target = $region8
  $region5: #{_wape_impl.1} parent=0 // loop_body
    %s15 = ssub.s32 %s10, 1
    %s16 = ssub.s32 %s10, 2
    %s23 = sadd.s32 1, %s18
    %p24 = scmp.ge.s32.totalorder %s23, 1
    %s25 = scalar_select %p24, 0, %s23
    %s26 = sadd.s32 1, %s17
    %s27 = scalar_select %p24, %s26, %s17
    %p28 = scmp.ge.s32.totalorder %s27, 2
    %s29 = scalar_select %p28, 0, %s27
    %s30 = sadd.s32 %s17, %s18
    %p31 = scmp.lt.s32.totalorder %s30, 1
    %s32 = scalar_select %p31, %s30, 1
    %s33 = sadd.s32 %s29, %s25
    %p34 = scmp.lt.s32.totalorder %s33, 1
    %s35 = scalar_select %p34, %s33, 1
    %s36 = ssub.s32 %s32, %s35
    %p37 = scmp.eq.s32.totalorder %s36, 0
    %s39 = sadd.s32 %s38, 1
    %s40 = scalar_select %p37, %s38, %s39
    %p43 = pneg %p37
    %p44 = scmp.eq.s32.totalorder %s10, 1
    %p45 = por %p43, %p44
    %p46 = scmp.ne.s32.totalorder %s38, %s41
    %p47 = scmp.eq.s32.totalorder %s10, 0
    %p48 = por %p46, %p47
    %p49 = scmp.ne.s32.totalorder %s38, %s41
    %p50 = scmp.eq.s32.totalorder %s15, 1
    %p51 = por %p49, %p50
    %p52 = scmp.ne.s32.totalorder %s41, %s42
    %p53 = scmp.eq.s32.totalorder %s15, 0
    %p54 = por %p52, %p53
    %p55 = scmp.ne.s32.totalorder %s41, %s42
    %p56 = scmp.eq.s32.totalorder %s16, 1
    %p57 = por %p55, %p56
    %p59 = scmp.ne.s32.totalorder %s42, %s58
    %p60 = scmp.eq.s32.totalorder %s16, 0
    %p61 = por %p59, %p60
    %s62 = sadd.s32 %s17, %s18
    %p63 = scmp.lt.s32.totalorder %s62, 1
    %s64 = scalar_select %p63, %s62, 1
    %s65 = sadd.s32 %s29, %s25
    %p66 = scmp.lt.s32.totalorder %s65, 1
    %s67 = scalar_select %p66, %s65, 1
    %s68 = ssub.s32 %s64, %s67
    %p69 = scmp.eq.s32.totalorder %s68, 0
    %s71 = sadd.s32 %s70, 1
    %s72 = scalar_select %p69, %s70, %s71
    %p75 = pneg %p69
    %p76 = scmp.eq.s32.totalorder %s10, 1
    %p77 = por %p75, %p76
    %p78 = scmp.ne.s32.totalorder %s70, %s73
    %p79 = scmp.eq.s32.totalorder %s10, 0
    %p80 = por %p78, %p79
    %p81 = scmp.ne.s32.totalorder %s70, %s73
    %p82 = scmp.eq.s32.totalorder %s15, 1
    %p83 = por %p81, %p82
    %p84 = scmp.ne.s32.totalorder %s73, %s74
    %p85 = scmp.eq.s32.totalorder %s15, 0
    %p86 = por %p84, %p85
    %p87 = scmp.ne.s32.totalorder %s73, %s74
    %p88 = scmp.eq.s32.totalorder %s16, 1
    %p89 = por %p87, %p88
    %p91 = scmp.ne.s32.totalorder %s74, %s90
    %p92 = scmp.eq.s32.totalorder %s16, 0
    %p93 = por %p91, %p92
    %s94 = ssub.s32 %s17, %s29
    %p95 = scmp.eq.s32.totalorder %s94, 0
    %s97 = sadd.s32 %s96, 1
    %s98 = scalar_select %p95, %s96, %s97
    %p101 = pneg %p95
    %p102 = scmp.eq.s32.totalorder %s10, 1
    %p103 = por %p101, %p102
    %p104 = scmp.ne.s32.totalorder %s96, %s99
    %p105 = scmp.eq.s32.totalorder %s10, 0
    %p106 = por %p104, %p105
    %p107 = scmp.ne.s32.totalorder %s96, %s99
    %p108 = scmp.eq.s32.totalorder %s15, 1
    %p109 = por %p107, %p108
    %p110 = scmp.ne.s32.totalorder %s99, %s100
    %p111 = scmp.eq.s32.totalorder %s15, 0
    %p112 = por %p110, %p111
    %p113 = scmp.ne.s32.totalorder %s99, %s100
    %p114 = scmp.eq.s32.totalorder %s16, 1
    %p115 = por %p113, %p114
    %p117 = scmp.ne.s32.totalorder %s100, %s116
    %p118 = scmp.eq.s32.totalorder %s16, 0
    %p119 = por %p117, %p118
    %s120 = ssub.s32 %s17, %s29
    %p121 = scmp.eq.s32.totalorder %s120, 0
    %s123 = sadd.s32 %s122, 1
    %s124 = scalar_select %p121, %s122, %s123
    %p127 = pneg %p121
    %p128 = scmp.eq.s32.totalorder %s10, 1
    %p129 = por %p127, %p128
    %p130 = scmp.ne.s32.totalorder %s122, %s125
    %p131 = scmp.eq.s32.totalorder %s10, 0
    %p132 = por %p130, %p131
    %p133 = scmp.ne.s32.totalorder %s122, %s125
    %p134 = scmp.eq.s32.totalorder %s15, 1
    %p135 = por %p133, %p134
    %p136 = scmp.ne.s32.totalorder %s125, %s126
    %p137 = scmp.eq.s32.totalorder %s15, 0
    %p138 = por %p136, %p137
    %p139 = scmp.ne.s32.totalorder %s125, %s126
    %p140 = scmp.eq.s32.totalorder %s16, 1
    %p141 = por %p139, %p140
    %p143 = scmp.ne.s32.totalorder %s126, %s142
    %p144 = scmp.eq.s32.totalorder %s16, 0
    %p145 = por %p143, %p144
    %p146 = scmp.le.s32.totalorder 1, %s10
    %p147 = scmp.lt.s32.totalorder %s10, 3
    %p148 = pnand %p146, %p147
    %p149 = pneg %p148
    // Predicated region
    $region9: #{_wape_impl.1} parent=5 // pred_check
      _
    $region10: #{_wape_impl.1} parent=5 // pred_check_branch
      %151 = sbr.rel (%p148) target = $region12
    $region11: #{_wape_impl.1} parent=5 // pred_region
      %s152 = ssub.s32 %s10, 1
    $region12: #{_wape_impl.1} parent=5 // pred_fallthru
      _
    %p153 = scmp.lt.s32.totalorder %s10, 2
    // Predicated region
    $region13: #{_wape_impl.1} parent=5 // pred_check
      %p154 = pneg %p153
    $region14: #{_wape_impl.1} parent=5 // pred_check_branch
      %156 = sbr.rel (%p154) target = $region16
    $region15: #{_wape_impl.1} parent=5 // pred_region
      // Predicated region
      $region17: #{_wape_impl.1} parent=15 // pred_check
        %p157 = pneg %p48
      $region18: #{_wape_impl.1} parent=15 // pred_check_branch
        %159 = sbr.rel (%p157) target = $region20
      $region19: #{_wape_impl.1} parent=15 // pred_region
        %s160 = sadd.s32 %s17, %s18
        %p161 = scmp.lt.s32.totalorder %s160, 1
        %s162 = scalar_select %p161, %s160, 1
        %p163 = scmp.lt.s32.totalorder %s162, 1
        %s164 = scalar_select %p163, %s162, 1
        %s165 = smul.addr %s164, 8
        %s166 = scalar_lea.vmem %s0, %s165
        %s167 = sadd.s32 %s17, %s18
        %p168 = scmp.lt.s32.totalorder %s167, 1
        %s169 = scalar_select %p168, %s167, 1
      $region20: #{_wape_impl.1} parent=15 // pred_fallthru
        _
      // Predicated region
      $region21: #{_wape_impl.1} parent=15 // pred_check
        %p170 = pneg %p80
      $region22: #{_wape_impl.1} parent=15 // pred_check_branch
        %172 = sbr.rel (%p170) target = $region24
      $region23: #{_wape_impl.1} parent=15 // pred_region
        %s173 = sadd.s32 %s17, %s18
        %p174 = scmp.lt.s32.totalorder %s173, 1
        %s175 = scalar_select %p174, %s173, 1
        %p176 = scmp.lt.s32.totalorder %s175, 1
        %s177 = scalar_select %p176, %s175, 1
        %s178 = smul.addr %s177, 8
        %s179 = scalar_lea.vmem %s1, %s178
        %s180 = sadd.s32 %s17, %s18
        %p181 = scmp.lt.s32.totalorder %s180, 1
        %s182 = scalar_select %p181, %s180, 1
      $region24: #{_wape_impl.1} parent=15 // pred_fallthru
        _
    $region16: #{_wape_impl.1} parent=5 // pred_fallthru
      _
    %p183 = scmp.le.s32.totalorder 1, %s10
    %p184 = scmp.lt.s32.totalorder %s10, 3
    %p185 = pnand %p183, %p184
    %p186 = pneg %p185
    // Predicated region
    $region25: #{_wape_impl.1} parent=5 // pred_check
      _
    $region26: #{_wape_impl.1} parent=5 // pred_check_branch
      %188 = sbr.rel (%p185) target = $region28
    $region27: #{_wape_impl.1} parent=5 // pred_region
      %s189 = ssub.s32 %s10, 1
      %s190 = sadd.s32 %s19, %s20
      %p191 = scmp.lt.s32.totalorder %s190, 1
      %s192 = scalar_select %p191, %s190, 1
      %p193 = scmp.lt.s32.totalorder %s192, 1
      %s194 = scalar_select %p193, %s192, 1
      %s195 = smul.addr %s194, 8
      %s196 = scalar_lea.vmem %s0, %s195
      %p197 = pneg %p54
      %p198 = pneg %p51
      %s199 = sadd.s32 %s19, %s20
      %p200 = scmp.lt.s32.totalorder %s199, 1
      %s201 = scalar_select %p200, %s199, 1
      %p202 = scmp.lt.s32.totalorder %s201, 1
      %s203 = scalar_select %p202, %s201, 1
      %s204 = smul.addr %s203, 8
      %s205 = scalar_lea.vmem %s1, %s204
      %p206 = pneg %p86
      %p207 = pneg %p83
      %p208 = pneg %p112
      %p209 = pneg %p109
      %p210 = scmp.lt.s32.totalorder %s19, 1
      %s211 = scalar_select %p210, %s19, 1
      %s212 = scalar_lea.vmem %s2, %s211
      %p213 = pneg %p138
      %p214 = pneg %p135
      %p215 = scmp.lt.s32.totalorder %s19, 1
      %s216 = scalar_select %p215, %s19, 1
      %s217 = scalar_lea.vmem %s3, %s216
      %s218 = sadd.s32 %s19, %s20
      %p219 = scmp.lt.s32.totalorder %s218, 1
      %s220 = scalar_select %p219, %s218, 1
      %p221 = scmp.lt.s32.totalorder %s220, 1
      %s222 = scalar_select %p221, %s220, 1
      %s223 = smul.addr %s222, 8
      %s224 = scalar_lea.vmem %s0, %s223
      %s225 = sadd.s32 %s19, %s20
      %p226 = scmp.lt.s32.totalorder %s225, 1
      %s227 = scalar_select %p226, %s225, 1
      %s228 = sadd.s32 %s19, %s20
      %p229 = scmp.lt.s32.totalorder %s228, 1
      %s230 = scalar_select %p229, %s228, 1
      %p231 = scmp.lt.s32.totalorder %s230, 1
      %s232 = scalar_select %p231, %s230, 1
      %s233 = smul.addr %s232, 8
      %s234 = scalar_lea.vmem %s1, %s233
      %s235 = sadd.s32 %s19, %s20
      %p236 = scmp.lt.s32.totalorder %s235, 1
      %s237 = scalar_select %p236, %s235, 1
      %p238 = scmp.lt.s32.totalorder %s19, 1
      %s239 = scalar_select %p238, %s19, 1
      %s240 = scalar_lea.vmem %s2, %s239
      %p241 = scmp.lt.s32.totalorder %s19, 1
      %s242 = scalar_select %p241, %s19, 1
      %s243 = scalar_lea.vmem %s3, %s242
      %p244 = scmp.eq.s32.totalorder %s20, 0
      // Predicated region
      $region29: #{_wape_impl.1} parent=27 // pred_check
        %p245 = pneg %p244
      $region30: #{_wape_impl.1} parent=27 // pred_check_branch
        %247 = sbr.rel (%p245) target = $region32
      $region31: #{_wape_impl.1} parent=27 // pred_region
        %248 = vst [vmem:[%s240] sm:$0x1] 0.0
        %249 = vst [vmem:[%s243] sm:$0x1] 0.0
      $region32: #{_wape_impl.1} parent=27 // pred_fallthru
        _
      %v250 = vld [vmem:[%s224] sm:$0xff]
      %v251 = vld [vmem:[%s234] sm:$0xff]
      %v252 = vsub.f32 %v250, %v251
      %v253 = vand.u32 2147483647, %v252
      %v254 = vand.u32 2147483647, %v251
      %v255 = vld [vmem:[%s240] sm:$0x1]
      %v256 = vrot.slane %v253, 4
      %v257 = vadd.f32 %v253, %v256
      %v258 = vrot.slane %v257, 2
      %v259 = vadd.f32 %v257, %v258
      %v260 = vrot.slane %v259, 1
      %v261 = vadd.f32 %v259, %v260
      %v262 = vadd.f32 %v255, %v261
      %263 = vst [vmem:[%s240] sm:$0x1] %v262
      %v264 = vld [vmem:[%s243] sm:$0x1]
      %v265 = vrot.slane %v254, 4
      %v266 = vadd.f32 %v254, %v265
      %v267 = vrot.slane %v266, 2
      %v268 = vadd.f32 %v266, %v267
      %v269 = vrot.slane %v268, 1
      %v270 = vadd.f32 %v268, %v269
      %v271 = vadd.f32 %v264, %v270
      %272 = vst [vmem:[%s243] sm:$0x1] %v271
      %p273 = scmp.lt.s32.totalorder %s19, 1
      %s274 = scalar_select %p273, %s19, 1
      %s275 = scalar_lea.vmem %s2, %s274
      %p276 = scmp.lt.s32.totalorder %s19, 1
      %s277 = scalar_select %p276, %s19, 1
      %s278 = scalar_lea.vmem %s3, %s277
      // Predicated region
      $region33: #{_wape_impl.1} parent=27 // pred_check
        %p279 = pneg %p109
      $region34: #{_wape_impl.1} parent=27 // pred_check_branch
        %281 = sbr.rel (%p279) target = $region36
      $region35: #{_wape_impl.1} parent=27 // pred_region
        _
      $region36: #{_wape_impl.1} parent=27 // pred_fallthru
        _
      // Predicated region
      $region37: #{_wape_impl.1} parent=27 // pred_check
        %p282 = pneg %p135
      $region38: #{_wape_impl.1} parent=27 // pred_check_branch
        %284 = sbr.rel (%p282) target = $region40
      $region39: #{_wape_impl.1} parent=27 // pred_region
        _
      $region40: #{_wape_impl.1} parent=27 // pred_fallthru
        _
    $region28: #{_wape_impl.1} parent=5 // pred_fallthru
      _
    %p285 = scmp.le.s32.totalorder 2, %s10
    // Predicated region
    $region41: #{_wape_impl.1} parent=5 // pred_check
      %p286 = pneg %p285
    $region42: #{_wape_impl.1} parent=5 // pred_check_branch
      %288 = sbr.rel (%p286) target = $region44
    $region43: #{_wape_impl.1} parent=5 // pred_region
      %s289 = ssub.s32 %s10, 2
      // Predicated region
      $region45: #{_wape_impl.1} parent=43 // pred_check
        %p290 = pneg %p115
      $region46: #{_wape_impl.1} parent=43 // pred_check_branch
        %292 = sbr.rel (%p290) target = $region48
      $region47: #{_wape_impl.1} parent=43 // pred_region
        %p293 = scmp.lt.s32.totalorder %s21, 1
        %s294 = scalar_select %p293, %s21, 1
        %s295 = scalar_lea.vmem %s2, %s294
      $region48: #{_wape_impl.1} parent=43 // pred_fallthru
        _
      // Predicated region
      $region49: #{_wape_impl.1} parent=43 // pred_check
        %p296 = pneg %p141
      $region50: #{_wape_impl.1} parent=43 // pred_check_branch
        %298 = sbr.rel (%p296) target = $region52
      $region51: #{_wape_impl.1} parent=43 // pred_region
        %p299 = scmp.lt.s32.totalorder %s21, 1
        %s300 = scalar_select %p299, %s21, 1
        %s301 = scalar_lea.vmem %s3, %s300
      $region52: #{_wape_impl.1} parent=43 // pred_fallthru
        _
    $region44: #{_wape_impl.1} parent=5 // pred_fallthru
      _
  $region6: #{_wape_impl.1} parent=0 // loop_footer
    %s14 = sadd.s32 1, %s10
  $region7: #{_wape_impl.1} parent=0 // loop_footer_branch
    %9 = sbr.rel target = $region3
  $region8: #{_wape_impl.1} parent=0 // loop_exit
    _

</llo_original>
